<compile_context>
chip_gen: v5e
topology: v5e:2x2
jax: 0.10.0
libtpu: 0.0.40
codegen_flags: <defaults>
</compile_context>

<pallas_src>
import jax
import jax.numpy as jnp
from jax.experimental import pallas as pl
from jax.experimental.pallas import tpu as pltpu


def _round_up(n, m):
    return ((n + m - 1) // m) * m


def decoder_kernel(x_ref, w1_ref, b1_ref, w2_ref, b2_ref, o_ref):
    # x: [TB, L] (f32 or bf16), w1: [L, Hp] bf16, b1: [1, Hp] f32,
    # w2: [Hp, D] bf16, b2: [1, D] f32, o: [TB, D] out_dtype.
    x = x_ref[...].astype(jnp.bfloat16)            # no-op if x already bf16
    h = jnp.dot(x, w1_ref[...], preferred_element_type=jnp.float32) + b1_ref[...]
    h = jnp.maximum(h, 0.0)                        # ReLU (f32, VPU)
    y = (jnp.dot(h.astype(jnp.bfloat16), w2_ref[...],
                 preferred_element_type=jnp.float32) + b2_ref[...])
    # sigmoid(y) = 0.5 * tanh(0.5 * y) + 0.5  — single EUP op, no inf edge case.
    o_ref[...] = (0.5 * jnp.tanh(0.5 * y) + 0.5).astype(o_ref.dtype)


def decoder_v1_forward(x, w1, b1, w2, b2, *, block_b=2048, out_dtype=jnp.bfloat16):
    """x: [B, latent_dim] (f32 or bf16); w1: [L, Hp] bf16; b1: [1, Hp] f32;
    w2: [Hp, D] bf16; b2: [1, D] f32. Returns [B, D] out_dtype (default bf16)."""
    B, L = x.shape
    Hp = w1.shape[1]
    D = w2.shape[1]

    # Sublane alignment for the batch-tiled arrays: 16 if any of them is a 2-byte
    # dtype (bf16 packs two rows per sublane pair), else 8.
    align = 16 if min(x.dtype.itemsize, jnp.dtype(out_dtype).itemsize) < 4 else 8

    Bp8 = _round_up(B, 8)
    if Bp8 <= align:
        # Tiny batch: one full-dim tile (full-dim blocks are exempt from the
        # (align,128) divisibility rule).
        TB = Bp8
        Bp = Bp8
    else:
        Bp_a = _round_up(B, align)
        # Near-even split so the tail tile is ~full; >=2 tiles so both v7x TCs work.
        num_tiles = max(pl.cdiv(Bp_a, block_b), 2)
        TB = _round_up(pl.cdiv(Bp_a, num_tiles), align)
        Bp = _round_up(Bp_a, TB)

    if Bp != B:
        x = jnp.pad(x, ((0, Bp - B), (0, 0)))
    grid = (Bp // TB,)

    # Actual per-step VMEM footprint + margin (don't claim all of v7x's 64 MiB).
    out_bytes = jnp.dtype(out_dtype).itemsize
    per_step_bytes = (
        2 * TB * L * x.dtype.itemsize        # double-buffered x tiles
        + 2 * TB * D * out_bytes             # double-buffered out tiles
        + TB * Hp * 4 + TB * D * 4           # f32 intermediates (h, y)
        + w1.size * w1.dtype.itemsize + w2.size * w2.dtype.itemsize
        + b1.size * b1.dtype.itemsize + b2.size * b2.dtype.itemsize
    )
    vmem_limit = min(per_step_bytes + 16 * 1024 * 1024, 48 * 1024 * 1024)

    cost = pl.CostEstimate(
        flops=2 * Bp * (L * Hp + Hp * D),
        transcendentals=Bp * D,                                   # tanh
        bytes_accessed=(Bp * L * x.dtype.itemsize + Bp * D * out_bytes
                        + w1.size * 2 + w2.size * 2
                        + b1.size * 4 + b2.size * 4),
    )

    out = pl.pallas_call(
        decoder_kernel,
        out_shape=jax.ShapeDtypeStruct((Bp, D), out_dtype),
        grid_spec=pltpu.PrefetchScalarGridSpec(
            num_scalar_prefetch=0,
            grid=grid,
            in_specs=[
                pl.BlockSpec((TB, L), lambda i: (i, 0)),   # x: tiled over batch
                pl.BlockSpec((L, Hp), lambda i: (0, 0)),   # w1: VMEM-resident
                pl.BlockSpec((1, Hp), lambda i: (0, 0)),   # b1: VMEM-resident
                pl.BlockSpec((Hp, D), lambda i: (0, 0)),   # w2: VMEM-resident
                pl.BlockSpec((1, D), lambda i: (0, 0)),    # b2: VMEM-resident
            ],
            out_specs=pl.BlockSpec((TB, D), lambda i: (i, 0)),
        ),
        compiler_params=pltpu.CompilerParams(
            dimension_semantics=("parallel",),             # both TCs on v7x
            vmem_limit_bytes=int(vmem_limit),
        ),
        cost_estimate=cost,
    )(x, w1, b1, w2, b2)

    return out[:B]


def init_params(key, latent_dim, h_dim, input_dim):
    """PyTorch nn.Linear-like uniform init, stored [in, out] (transposed vs torch),
    hidden dim zero-padded to a multiple of 128 lanes, weights in bf16."""
    h_pad = _round_up(h_dim, 128)
    k1, k2, k3, k4 = jax.random.split(key, 4)
    lim1 = 1.0 / (latent_dim ** 0.5)
    lim2 = 1.0 / (h_dim ** 0.5)

    w1 = jax.random.uniform(k1, (latent_dim, h_dim), jnp.float32, -lim1, lim1)
    b1 = jax.random.uniform(k2, (1, h_dim), jnp.float32, -lim1, lim1)
    w2 = jax.random.uniform(k3, (h_dim, input_dim), jnp.float32, -lim2, lim2)
    b2 = jax.random.uniform(k4, (1, input_dim), jnp.float32, -lim2, lim2)

    # Zero-pad hidden dim to h_pad: padded columns of w1 / entries of b1 are zero,
    # so ReLU of padded lanes is zero and padded rows of w2 (zero) contribute nothing.
    w1_p = jnp.zeros((latent_dim, h_pad), jnp.float32).at[:, :h_dim].set(w1)
    b1_p = jnp.zeros((1, h_pad), jnp.float32).at[:, :h_dim].set(b1)
    w2_p = jnp.zeros((h_pad, input_dim), jnp.float32).at[:h_dim, :].set(w2)

    return w1_p.astype(jnp.bfloat16), b1_p, w2_p.astype(jnp.bfloat16), b2


if __name__ == "__main__":
    # Small shapes implied by the module: x is [batch, latent_dim].
    batch, latent_dim, h_dim, input_dim = 8, 32, 64, 128

    key = jax.random.PRNGKey(0)
    kx, kp = jax.random.split(key)
    x = jax.random.normal(kx, (batch, latent_dim), jnp.float32)
    w1, b1, w2, b2 = init_params(kp, latent_dim, h_dim, input_dim)

    out = decoder_v1_forward(x, w1, b1, w2, b2)
    out = jax.block_until_ready(out)

    # Pure-JAX reference (same bf16 weights promoted to f32; padded hidden lanes are
    # zero, so this matches the unpadded H=64 module up to bf16 precision).
    w1f = w1.astype(jnp.float32)
    w2f = w2.astype(jnp.float32)
    ref = jax.nn.sigmoid(jnp.maximum(x @ w1f + b1, 0.0) @ w2f + b2)

    assert out.shape == (batch, input_dim)
    err = jnp.max(jnp.abs(out.astype(jnp.float32) - ref))
    assert jnp.allclose(out.astype(jnp.float32), ref, atol=2e-2, rtol=2e-2), float(err)

    print("KERNEL_OK")
</pallas_src>

<mosaic_0001>
module attributes {stable_mosaic.version = 11 : i64} {
  func.func @decoder_kernel(%arg0: i32, %arg1: memref<8x32xf32, #tpu.memory_space<vmem>>, %arg2: memref<32x128xbf16, #tpu.memory_space<vmem>>, %arg3: memref<1x128xf32, #tpu.memory_space<vmem>>, %arg4: memref<128x128xbf16, #tpu.memory_space<vmem>>, %arg5: memref<1x128xf32, #tpu.memory_space<vmem>>, %arg6: memref<8x128xbf16, #tpu.memory_space<vmem>>) attributes {dimension_semantics = [#tpu.dimension_semantics<parallel>], iteration_bounds = array<i64: 1>, scalar_prefetch = 0 : i64, scratch_operands = 0 : i64, tpu.core_type = #tpu.core_type<tc>, window_params = [{transform_indices = @transform_0, window_bounds = array<i64: 8, 32>}, {pipeline_mode = #tpu.pipeline_mode<synchronous>, transform_indices = @transform_1, window_bounds = array<i64: 32, 128>}, {pipeline_mode = #tpu.pipeline_mode<synchronous>, transform_indices = @transform_2, window_bounds = array<i64: 1, 128>}, {pipeline_mode = #tpu.pipeline_mode<synchronous>, transform_indices = @transform_3, window_bounds = array<i64: 128, 128>}, {pipeline_mode = #tpu.pipeline_mode<synchronous>, transform_indices = @transform_4, window_bounds = array<i64: 1, 128>}, {transform_indices = @transform_5, window_bounds = array<i64: 8, 128>}]} {
    %c0 = arith.constant 0 : index
    %c0_0 = arith.constant 0 : index
    %0 = vector.load %arg1[%c0, %c0_0] : memref<8x32xf32, #tpu.memory_space<vmem>>, vector<8x32xf32>
    %1 = arith.truncf %0 : vector<8x32xf32> to vector<8x32xbf16>
    %c0_1 = arith.constant 0 : index
    %c0_2 = arith.constant 0 : index
    %2 = vector.load %arg2[%c0_1, %c0_2] : memref<32x128xbf16, #tpu.memory_space<vmem>>, vector<32x128xbf16>
    %cst = arith.constant dense<0.000000e+00> : vector<8x128xf32>
    %3 = tpu.matmul %1, %2, %cst {dimension_numbers = #tpu.dot_dimension_numbers<[1], [0], [0], [1], [0, 0, 1, 1], [], []>} : vector<8x32xbf16>, vector<32x128xbf16>, vector<8x128xf32> -> vector<8x128xf32>
    %c0_3 = arith.constant 0 : index
    %c0_4 = arith.constant 0 : index
    %4 = vector.load %arg3[%c0_3, %c0_4] : memref<1x128xf32, #tpu.memory_space<vmem>>, vector<1x128xf32>
    %5 = vector.broadcast %4 : vector<1x128xf32> to vector<8x128xf32>
    %6 = arith.addf %3, %5 : vector<8x128xf32>
    %cst_5 = arith.constant 0.000000e+00 : f32
    %7 = vector.broadcast %cst_5 : f32 to vector<8x128xf32>
    %8 = arith.maximumf %6, %7 : vector<8x128xf32>
    %9 = arith.truncf %8 : vector<8x128xf32> to vector<8x128xbf16>
    %c0_6 = arith.constant 0 : index
    %c0_7 = arith.constant 0 : index
    %10 = vector.load %arg4[%c0_6, %c0_7] : memref<128x128xbf16, #tpu.memory_space<vmem>>, vector<128x128xbf16>
    %cst_8 = arith.constant dense<0.000000e+00> : vector<8x128xf32>
    %11 = tpu.matmul %9, %10, %cst_8 {dimension_numbers = #tpu.dot_dimension_numbers<[1], [0], [0], [1], [0, 0, 1, 1], [], []>} : vector<8x128xbf16>, vector<128x128xbf16>, vector<8x128xf32> -> vector<8x128xf32>
    %c0_9 = arith.constant 0 : index
    %c0_10 = arith.constant 0 : index
    %12 = vector.load %arg5[%c0_9, %c0_10] : memref<1x128xf32, #tpu.memory_space<vmem>>, vector<1x128xf32>
    %13 = vector.broadcast %12 : vector<1x128xf32> to vector<8x128xf32>
    %14 = arith.addf %11, %13 : vector<8x128xf32>
    %cst_11 = arith.constant 5.000000e-01 : f32
    %15 = vector.broadcast %cst_11 : f32 to vector<8x128xf32>
    %16 = arith.mulf %15, %14 : vector<8x128xf32>
    %17 = math.tanh %16 : vector<8x128xf32>
    %cst_12 = arith.constant 5.000000e-01 : f32
    %18 = vector.broadcast %cst_12 : f32 to vector<8x128xf32>
    %19 = arith.mulf %18, %17 : vector<8x128xf32>
    %cst_13 = arith.constant 5.000000e-01 : f32
    %20 = vector.broadcast %cst_13 : f32 to vector<8x128xf32>
    %21 = arith.addf %19, %20 : vector<8x128xf32>
    %22 = arith.truncf %21 : vector<8x128xf32> to vector<8x128xbf16>
    %c0_14 = arith.constant 0 : index
    %c0_15 = arith.constant 0 : index
    %23 = vector.load %arg6[%c0_14, %c0_15] : memref<8x128xbf16, #tpu.memory_space<vmem>>, vector<8x128xbf16>
    tpu.vector_store %arg6[%c0_14, %c0_15], %22 {strides = array<i32>} : memref<8x128xbf16, #tpu.memory_space<vmem>>, vector<8x128xbf16>,
    return
  }
  func.func @transform_0(%arg0: i32) -> (i32, i32) {
    %c0_i32 = arith.constant 0 : i32
    %c0_i32_0 = arith.constant 0 : i32
    return %arg0, %c0_i32 : i32, i32
  }
  func.func @transform_1(%arg0: i32) -> (i32, i32) {
    %c0_i32 = arith.constant 0 : i32
    %c0_i32_0 = arith.constant 0 : i32
    %c0_i32_1 = arith.constant 0 : i32
    return %c0_i32, %c0_i32_0 : i32, i32
  }
  func.func @transform_2(%arg0: i32) -> (i32, i32) {
    %c0_i32 = arith.constant 0 : i32
    %c0_i32_0 = arith.constant 0 : i32
    %c0_i32_1 = arith.constant 0 : i32
    return %c0_i32, %c0_i32_0 : i32, i32
  }
  func.func @transform_3(%arg0: i32) -> (i32, i32) {
    %c0_i32 = arith.constant 0 : i32
    %c0_i32_0 = arith.constant 0 : i32
    %c0_i32_1 = arith.constant 0 : i32
    return %c0_i32, %c0_i32_0 : i32, i32
  }
  func.func @transform_4(%arg0: i32) -> (i32, i32) {
    %c0_i32 = arith.constant 0 : i32
    %c0_i32_0 = arith.constant 0 : i32
    %c0_i32_1 = arith.constant 0 : i32
    return %c0_i32, %c0_i32_0 : i32, i32
  }
  func.func @transform_5(%arg0: i32) -> (i32, i32) {
    %c0_i32 = arith.constant 0 : i32
    %c0_i32_0 = arith.constant 0 : i32
    return %arg0, %c0_i32 : i32, i32
  }
}

</mosaic_0001>

<llo_original>
// kernel: tpu_custom_call.1
$region0: #{tpu_custom_call.1}
  #allocation0 [shape = 'u32[]', space=smem, size = 0x4, offset = 0x4, fixed_abs, tag = 'smem constant byte address 0x4 - core index']
  #allocation1 [shape = 'u32[72,128]{1,0:T(1,128)}', space=vmem, size = 0x9000, scoped, tag = 'internal scratch']
  %s0 = inlined_call_operand.hbm [shape: f32[8,32], index: 0, kind: input, shape index: {}]
  %s1 = inlined_call_operand.hbm [shape: bf16[32,128], index: 1, kind: input, shape index: {}]
  %s2 = inlined_call_operand.vmem [shape: f32[1,128], index: 2, kind: input, shape index: {}]
  %s3 = inlined_call_operand.hbm [shape: bf16[128,128], index: 3, kind: input, shape index: {}]
  %s4 = inlined_call_operand.vmem [shape: f32[1,128], index: 4, kind: input, shape index: {}]
  %s5 = inlined_call_operand.hbm [shape: bf16[8,128], index: 5, kind: output, shape index: {}]
  %s6 = sld [smem:[#allocation0]]
  $region42: #{tpu_custom_call.1} parent=0
    _
  %s8 = ssub.s32 1, %s6
  %s9 = scalar_select 0, %s8, %s6
  $region1: #{tpu_custom_call.1} parent=0
    #allocation2 [shape = 'u8[4096]{0}', space=vmem, size = 0x1000, scoped, tag = 'input window, operand 0, single buffered']
    #allocation3 [shape = 's32[1]{0}', space=sflag, size = 0x4, scoped, tag = 'scoped memory for tpu_custom_call.1']
    #allocation4 [shape = 's32[1]{0}', space=sflag, size = 0x4, scoped, tag = 'scoped memory for tpu_custom_call.1']
    #allocation5 [shape = 'u8[8192]{0}', space=vmem, size = 0x2000, scoped, tag = 'input window, operand 1, single buffered']
    #allocation6 [shape = 's32[1]{0}', space=sflag, size = 0x4, scoped, tag = 'scoped memory for tpu_custom_call.1']
    #allocation7 [shape = 'u8[32768]{0}', space=vmem, size = 0x8000, scoped, tag = 'input window, operand 3, single buffered']
    #allocation8 [shape = 'u8[2048]{0}', space=vmem, size = 0x800, scoped, tag = 'output window, operand 0, single buffered']
    %10 = vsyncpa [#allocation3], 0
    %11 = vsyncpa [#allocation6], 0
    %12 = vsyncpa [#allocation4], 0
    // Predicated region
    $region2: #{tpu_custom_call.1} parent=1 // pred_check
      _
    $region3: #{tpu_custom_call.1} parent=1 // pred_check_branch
      %14 = sbr.rel (0) target = $region5
    $region4: #{tpu_custom_call.1} parent=1 // pred_region
      %16 = vsyncadd [#allocation3], 0
      %s18 = sshll.u32 %s0, 4
      %s19 = int_to_ptr.hbm [resolvable:$true] %s18
      %s20 = sshll.u32 [#allocation2], 4
      %s21 = int_to_ptr.vmem [resolvable:$true] %s20
      %23 = dma.hbm_to_vmem [thread:$0]  %s19, 128, %s21, [#allocation3]
    $region5: #{tpu_custom_call.1} parent=1 // pred_fallthru
      _
    // Predicated region
    $region6: #{tpu_custom_call.1} parent=1 // pred_check
      _
    $region7: #{tpu_custom_call.1} parent=1 // pred_check_branch
      %25 = sbr.rel (0) target = $region9
    $region8: #{tpu_custom_call.1} parent=1 // pred_region
      %27 = vsyncadd [#allocation6], 0
      %s28 = sshll.u32 %s1, 4
      %s29 = int_to_ptr.hbm [resolvable:$true] %s28
      %s30 = sshll.u32 [#allocation5], 4
      %s31 = int_to_ptr.vmem [resolvable:$true] %s30
      %36 = dma.hbm_to_vmem [thread:$0]  %s29, 256, %s31, [#allocation6], 64, 64, 4
    $region9: #{tpu_custom_call.1} parent=1 // pred_fallthru
      _
    // Predicated region
    $region10: #{tpu_custom_call.1} parent=1 // pred_check
      _
    $region11: #{tpu_custom_call.1} parent=1 // pred_check_branch
      %38 = sbr.rel (0) target = $region13
    $region12: #{tpu_custom_call.1} parent=1 // pred_region
      _
    $region13: #{tpu_custom_call.1} parent=1 // pred_fallthru
      _
    // Predicated region
    $region14: #{tpu_custom_call.1} parent=1 // pred_check
      _
    $region15: #{tpu_custom_call.1} parent=1 // pred_check_branch
      %40 = sbr.rel (0) target = $region17
    $region16: #{tpu_custom_call.1} parent=1 // pred_region
      %42 = vsyncadd [#allocation6], 0
      %s43 = sshll.u32 %s3, 4
      %s44 = int_to_ptr.hbm [resolvable:$true] %s43
      %s45 = sshll.u32 [#allocation7], 4
      %s46 = int_to_ptr.vmem [resolvable:$true] %s45
      %51 = dma.hbm_to_vmem [thread:$0]  %s44, 1024, %s46, [#allocation6], 64, 64, 4
    $region17: #{tpu_custom_call.1} parent=1 // pred_fallthru
      _
    // Predicated region
    $region18: #{tpu_custom_call.1} parent=1 // pred_check
      _
    $region19: #{tpu_custom_call.1} parent=1 // pred_check_branch
      %53 = sbr.rel (0) target = $region21
    $region20: #{tpu_custom_call.1} parent=1 // pred_region
      _
    $region21: #{tpu_custom_call.1} parent=1 // pred_fallthru
      _
    // Predicated region
    $region22: #{tpu_custom_call.1} parent=1 // pred_check
      _
    $region23: #{tpu_custom_call.1} parent=1 // pred_check_branch
      %55 = sbr.rel (0) target = $region25
    $region24: #{tpu_custom_call.1} parent=1 // pred_region
      %57 = dma.done [#allocation3], 128
    $region25: #{tpu_custom_call.1} parent=1 // pred_fallthru
      _
    // Predicated region
    $region26: #{tpu_custom_call.1} parent=1 // pred_check
      _
    $region27: #{tpu_custom_call.1} parent=1 // pred_check_branch
      %59 = sbr.rel (0) target = $region29
    $region28: #{tpu_custom_call.1} parent=1 // pred_region
      %61 = dma.done [#allocation6], 256
    $region29: #{tpu_custom_call.1} parent=1 // pred_fallthru
      _
    // Predicated region
    $region30: #{tpu_custom_call.1} parent=1 // pred_check
      _
    $region31: #{tpu_custom_call.1} parent=1 // pred_check_branch
      %63 = sbr.rel (0) target = $region33
    $region32: #{tpu_custom_call.1} parent=1 // pred_region
      %65 = dma.done [#allocation6], 1024
    $region33: #{tpu_custom_call.1} parent=1 // pred_fallthru
      _
    %v67 = vld [vmem:[#allocation2] sm:$0xff]
    %v68 = vpack.c.bf16 %v67, %v67
    %v69 = vld [vmem:[#allocation5] sm:$0xf]
    %v70 = vld [vmem:[#allocation5 + $0x4] sm:$0xf]
    %v71 = vld [vmem:[#allocation5 + $0x8] sm:$0xf]
    %v72 = vld [vmem:[#allocation5 + $0xc] sm:$0xf]
    %v73 = vld [vmem:[%s2] sm:$0x1]
    %v75 = vperm.slane %v73, 0
    %v81 = vunpack.c.l.b16 %v69
    %v82 = vunpack.c.l.b16 %v70
    %v83 = vunpack.c.l.b16 %v71
    %v84 = vunpack.c.l.b16 %v72
    %v85 = vpack.c.b16 %v82, %v81
    %v86 = vpack.c.b16 %v84, %v83
    %vm89 = vcmask 261120
    %v91 = vsel %vm89, %v68, 0
    %93 = vmatpush.bf16.msra.mxu0 0
    %94 = vmatpush.bf16.msra.mxu0 0
    %95 = vmatpush.bf16.msra.mxu0 0
    %96 = vmatpush.bf16.msra.mxu0 0
    %97 = vmatpush.bf16.msra.mxu0 0
    %98 = vmatpush.bf16.msra.mxu0 0
    %99 = vmatpush.bf16.msra.mxu0 %v86
    %100 = vmatpush.bf16.msra.mxu0 %v85
    %101 = vmatmul.bf16.gmra.mxu0 %v91
    %v102 = vpop.f32.mrf.mxu0
    %v103 = vadd.f32 %v75, %v102
    %v104 = vpop.f32.mrf.mxu0
    %105 = vdwg.mxu0
    %v106 = vmax.f32 %v103, 0.0
    %v107 = vpack.c.bf16 %v106, %v106
    %v108 = vld [vmem:[#allocation7] sm:$0xf]
    %v109 = vld [vmem:[#allocation7 + $0x4] sm:$0xf]
    %v110 = vld [vmem:[#allocation7 + $0x8] sm:$0xf]
    %v111 = vld [vmem:[#allocation7 + $0xc] sm:$0xf]
    %v112 = vld [vmem:[#allocation7 + $0x10] sm:$0xf]
    %v113 = vld [vmem:[#allocation7 + $0x14] sm:$0xf]
    %v114 = vld [vmem:[#allocation7 + $0x18] sm:$0xf]
    %v115 = vld [vmem:[#allocation7 + $0x1c] sm:$0xf]
    %v116 = vld [vmem:[#allocation7 + $0x20] sm:$0xf]
    %v117 = vld [vmem:[#allocation7 + $0x24] sm:$0xf]
    %v118 = vld [vmem:[#allocation7 + $0x28] sm:$0xf]
    %v119 = vld [vmem:[#allocation7 + $0x2c] sm:$0xf]
    %v120 = vld [vmem:[#allocation7 + $0x30] sm:$0xf]
    %v121 = vld [vmem:[#allocation7 + $0x34] sm:$0xf]
    %v122 = vld [vmem:[#allocation7 + $0x38] sm:$0xf]
    %v123 = vld [vmem:[#allocation7 + $0x3c] sm:$0xf]
    %v124 = vld [vmem:[%s4] sm:$0x1]
    %v126 = vperm.slane %v124, 0
    %v144 = vunpack.c.l.b16 %v108
    %v145 = vunpack.c.l.b16 %v109
    %v146 = vunpack.c.l.b16 %v110
    %v147 = vunpack.c.l.b16 %v111
    %v148 = vunpack.c.l.b16 %v112
    %v149 = vunpack.c.l.b16 %v113
    %v150 = vunpack.c.l.b16 %v114
    %v151 = vunpack.c.l.b16 %v115
    %v152 = vunpack.c.l.b16 %v116
    %v153 = vunpack.c.l.b16 %v117
    %v154 = vunpack.c.l.b16 %v118
    %v155 = vunpack.c.l.b16 %v119
    %v156 = vunpack.c.l.b16 %v120
    %v157 = vunpack.c.l.b16 %v121
    %v158 = vunpack.c.l.b16 %v122
    %v159 = vunpack.c.l.b16 %v123
    %v160 = vpack.c.b16 %v145, %v144
    %v161 = vpack.c.b16 %v147, %v146
    %v162 = vpack.c.b16 %v149, %v148
    %v163 = vpack.c.b16 %v151, %v150
    %v164 = vpack.c.b16 %v153, %v152
    %v165 = vpack.c.b16 %v155, %v154
    %v166 = vpack.c.b16 %v157, %v156
    %v167 = vpack.c.b16 %v159, %v158
    %176 = vmatpush.bf16.msra.mxu0 %v167
    %177 = vmatpush.bf16.msra.mxu0 %v166
    %178 = vmatpush.bf16.msra.mxu0 %v165
    %179 = vmatpush.bf16.msra.mxu0 %v164
    %180 = vmatpush.bf16.msra.mxu0 %v163
    %181 = vmatpush.bf16.msra.mxu0 %v162
    %182 = vmatpush.bf16.msra.mxu0 %v161
    %183 = vmatpush.bf16.msra.mxu0 %v160
    %184 = vmatmul.bf16.gmra.mxu0 %v107
    %v185 = vpop.f32.mrf.mxu0
    %v186 = vadd.f32 %v126, %v185
    %v187 = vpop.f32.mrf.mxu0
    %188 = vdwg.mxu0
    %v189 = vmul.f32 %v186, 0.5
    %v190 = vtanh.pop %v189
    %v191 = vmul.f32 %v190, 0.5
    %v192 = vadd.f32 %v191, 0.5
    %v193 = vpack.c.bf16 %v192, %v192
    %194 = vst [vmem:[#allocation8] sm:$0xf] %v193
    // Predicated region
    $region34: #{tpu_custom_call.1} parent=1 // pred_check
      _
    $region35: #{tpu_custom_call.1} parent=1 // pred_check_branch
      %196 = sbr.rel (0) target = $region37
    $region36: #{tpu_custom_call.1} parent=1 // pred_region
      %198 = vsyncadd [#allocation4], 0
      %s200 = sshll.u32 [#allocation8], 4
      %s201 = int_to_ptr.vmem [resolvable:$true] %s200
      %s202 = sshll.u32 %s5, 4
      %s203 = int_to_ptr.hbm [resolvable:$true] %s202
      %205 = dma.vmem_to_hbm [thread:$0]  %s201, 64, %s203, [#allocation4]
    $region37: #{tpu_custom_call.1} parent=1 // pred_fallthru
      _
    // Predicated region
    $region38: #{tpu_custom_call.1} parent=1 // pred_check
      _
    $region39: #{tpu_custom_call.1} parent=1 // pred_check_branch
      %207 = sbr.rel (0) target = $region41
    $region40: #{tpu_custom_call.1} parent=1 // pred_region
      %209 = dma.done [#allocation4], 64
    $region41: #{tpu_custom_call.1} parent=1 // pred_fallthru
      _
    %210 = vsyncpa [#allocation3], 1
    %211 = vsyncpa [#allocation6], 1
    %212 = vsyncpa [#allocation4], 1

</llo_original>
